<compile_context>
chip_gen: v5e
topology: v5e:2x2
jax: 0.10.0
libtpu: 0.0.40
codegen_flags: <defaults>
</compile_context>

<pallas_src>
import jax
import jax.numpy as jnp
from jax.experimental import pallas as pl
from jax.experimental.pallas import tpu as pltpu

# Module hyperparameters: ConvTransBlock(in_ch=4, out_ch=8, kernal=4, stride=2, padding=1)
CIN, COUT = 4, 8
K, S, P = 4, 2, 1
N, H, W = 2, 16, 16

HO = (H - 1) * S - 2 * P + K      # 32
WO = (W - 1) * S - 2 * P + K      # 32
PAD = K - 1 - P                   # 2 (only used by the XLA reference check)

NPIX = N * H * W                  # 512  matmul lane dimension, cols = (n, i, j)
KDIM = 3 * 3 * CIN                # 36   contraction: shared 3x3 patch x CIN
MDIM = 2 * 2 * COUT               # 32   output rows: (ph, pw, cout)


def convt_relu_kernel(w_ref, p_ref, b_ref, o_ref):
    # w_ref: (MDIM, KDIM) = (32, 36)   packed polyphase weights
    # p_ref: (KDIM, NPIX) = (36, 512)  im2col patches, cols = (n, i, j)
    # b_ref: (MDIM, 1)                 bias replicated over the 4 phases
    # o_ref: (MDIM, NPIX) = (32, 512)  lane-dense output
    acc = jnp.dot(w_ref[...], p_ref[...], preferred_element_type=jnp.float32)
    o_ref[...] = jnp.maximum(acc + b_ref[...], 0.0).astype(o_ref.dtype)


def prepare_convt_params(weight, bias):
    """Repack ConvTranspose2d params once (hoisted out of the per-call path).

    weight: (CIN, COUT, K, K) — PyTorch ConvTranspose2d layout.
    Output pixel (2i+ph, 2j+pw) = bias[c] + sum over dh,dw in {0,1}, cin of
        x[n, cin, i+dh+ph-1, j+dw+pw-1] * weight[cin, c, 3-2dh-ph, 3-2dw-pw]
    i.e. a 2x2 stencil per phase, embedded at position (r, s) = (dh+ph, dw+pw)
    of the shared 3x3 patch.
    Returns w_packed (2*2*COUT, 3*3*CIN) with rows=(ph,pw,c), cols=(r,s,cin),
    and b_packed (2*2*COUT, 1).
    """
    w6 = jnp.zeros((2, 2, COUT, 3, 3, CIN), weight.dtype)
    for ph in range(2):
        for pw in range(2):
            for dh in range(2):
                for dw in range(2):
                    r, s = dh + ph, dw + pw
                    kh, kw = 2 * dh + ph, 2 * dw + pw
                    w6 = w6.at[ph, pw, :, r, s, :].set(
                        weight[:, :, K - 1 - kh, K - 1 - kw].T)  # (COUT, CIN)
    w_packed = w6.reshape(MDIM, KDIM)
    b_packed = jnp.tile(bias, 4).reshape(MDIM, 1)
    return w_packed, b_packed


_COST = pl.CostEstimate(
    flops=2 * MDIM * KDIM * NPIX,
    transcendentals=0,
    bytes_accessed=4 * (MDIM * KDIM + KDIM * NPIX + MDIM + MDIM * NPIX),
)


@jax.jit
def conv_trans_block_forward(x_nchw, w_packed, b_packed):
    """ReLU(ConvTranspose2d(x)) in NCHW via one gridless, lane-dense Pallas matmul."""
    # Shared 3x3 im2col patch matrix (transposed): rows=(r, s, cin), cols=(n, i, j).
    # Tiny (36x512 f32 ~ 72 KB) layout-only XLA prologue; kept out of the kernel
    # so the kernel body has no relayout-inducing slices/reshapes.
    x_pad = jnp.pad(x_nchw, ((0, 0), (0, 0), (1, 1), (1, 1)))        # (N,CIN,H+2,W+2)
    taps = [x_pad[:, :, r:r + H, s:s + W] for r in range(3) for s in range(3)]
    p = jnp.stack(taps, axis=0)                                      # (9,N,CIN,H,W)
    p = jnp.transpose(p, (0, 2, 1, 3, 4)).reshape(KDIM, NPIX)        # (36, 512)

    o_t = pl.pallas_call(
        convt_relu_kernel,
        out_shape=jax.ShapeDtypeStruct((MDIM, NPIX), x_nchw.dtype),
        in_specs=[pl.BlockSpec(memory_space=pltpu.MemorySpace.VMEM)] * 3,
        out_specs=pl.BlockSpec(memory_space=pltpu.MemorySpace.VMEM),
        cost_estimate=_COST,
    )(w_packed, p, b_packed)

    # Depth-to-space: (ph, pw, c, n, i, j) -> (n, c, i, ph, j, pw) -> NCHW.
    o6 = o_t.reshape(2, 2, COUT, N, H, W)
    return jnp.transpose(o6, (3, 2, 4, 0, 5, 1)).reshape(N, COUT, HO, WO)


if __name__ == "__main__":
    key = jax.random.PRNGKey(0)
    kx, kw, kb = jax.random.split(key, 3)

    x = jax.random.normal(kx, (N, CIN, H, W), jnp.float32)
    # Deterministic parameter init (shapes per nn.ConvTranspose2d).
    bound = 1.0 / float((CIN * K * K) ** 0.5)
    weight = jax.random.uniform(kw, (CIN, COUT, K, K), jnp.float32, -bound, bound)
    bias = jax.random.uniform(kb, (COUT,), jnp.float32, -bound, bound)

    # One-time parameter repack (outside the per-call path).
    w_packed, b_packed = prepare_convt_params(weight, bias)

    out = jax.block_until_ready(conv_trans_block_forward(x, w_packed, b_packed))
    assert out.shape == (N, COUT, HO, WO)

    # Sanity check against an XLA transposed-conv reference.
    w_oihw = jnp.transpose(weight[:, :, ::-1, ::-1], (1, 0, 2, 3))
    ref = jax.lax.conv_general_dilated(
        x, w_oihw, window_strides=(1, 1),
        padding=[(PAD, PAD), (PAD, PAD)], lhs_dilation=(S, S),
        dimension_numbers=("NCHW", "OIHW", "NCHW"))
    ref = jnp.maximum(ref + bias[None, :, None, None], 0.0)
    assert jnp.allclose(out, ref, atol=1e-4, rtol=1e-4), "mismatch vs reference"

    # TODO(synk): the surrounding Ccgenerator graph (ccbn/Embedding-conditioned
    # norm, the other Conv/ConvTrans blocks, skip concats, tanh head) is not
    # reproduced here; this kernel covers the ConvTransBlock forward only (the
    # ccbn inside ConvTransBlock is dead code in the reference and is skipped).
    print("KERNEL_OK")
</pallas_src>

<mosaic_0001>
module attributes {stable_mosaic.version = 11 : i64} {
  func.func @convt_relu_kernel(%arg0: memref<32x36xf32, #tpu.memory_space<vmem>>, %arg1: memref<36x512xf32, #tpu.memory_space<vmem>>, %arg2: memref<32x1xf32, #tpu.memory_space<vmem>>, %arg3: memref<32x512xf32, #tpu.memory_space<vmem>>) attributes {dimension_semantics = [], scalar_prefetch = 0 : i64, scratch_operands = 0 : i64, tpu.core_type = #tpu.core_type<tc>} {
    %c0 = arith.constant 0 : index
    %c0_0 = arith.constant 0 : index
    %0 = vector.load %arg0[%c0, %c0_0] : memref<32x36xf32, #tpu.memory_space<vmem>>, vector<32x36xf32>
    %c0_1 = arith.constant 0 : index
    %c0_2 = arith.constant 0 : index
    %1 = vector.load %arg1[%c0_1, %c0_2] : memref<36x512xf32, #tpu.memory_space<vmem>>, vector<36x512xf32>
    %cst = arith.constant dense<0.000000e+00> : vector<32x512xf32>
    %2 = tpu.matmul %0, %1, %cst {dimension_numbers = #tpu.dot_dimension_numbers<[1], [0], [0], [1], [0, 0, 1, 1], [], []>} : vector<32x36xf32>, vector<36x512xf32>, vector<32x512xf32> -> vector<32x512xf32>
    %c0_3 = arith.constant 0 : index
    %c0_4 = arith.constant 0 : index
    %3 = vector.load %arg2[%c0_3, %c0_4] : memref<32x1xf32, #tpu.memory_space<vmem>>, vector<32x1xf32>
    %4 = vector.broadcast %3 : vector<32x1xf32> to vector<32x512xf32>
    %5 = arith.addf %2, %4 : vector<32x512xf32>
    %cst_5 = arith.constant 0.000000e+00 : f32
    %6 = vector.broadcast %cst_5 : f32 to vector<32x512xf32>
    %7 = arith.maximumf %5, %6 : vector<32x512xf32>
    %c0_6 = arith.constant 0 : index
    %c0_7 = arith.constant 0 : index
    %8 = vector.load %arg3[%c0_6, %c0_7] : memref<32x512xf32, #tpu.memory_space<vmem>>, vector<32x512xf32>
    tpu.vector_store %arg3[%c0_6, %c0_7], %7 {strides = array<i32>} : memref<32x512xf32, #tpu.memory_space<vmem>>, vector<32x512xf32>,
    return
  }
}

</mosaic_0001>

<llo_original>
// kernel: conv_trans_block_forward.1
$region0: #{conv_trans_block_forward.1}
  #allocation0 [shape = 'u32[]', space=smem, size = 0x4, offset = 0x4, fixed_abs, tag = 'smem constant byte address 0x4 - core index']
  #allocation1 [shape = 'u32[72,128]{1,0:T(1,128)}', space=vmem, size = 0x9000, scoped, tag = 'internal scratch']
  %s0 = inlined_call_operand.vmem [shape: f32[32,36], index: 0, kind: input, shape index: {}]
  %s1 = inlined_call_operand.vmem [shape: f32[36,512], index: 1, kind: input, shape index: {}]
  %s2 = inlined_call_operand.vmem [shape: f32[32,1], index: 2, kind: input, shape index: {}]
  %s3 = inlined_call_operand.vmem [shape: f32[32,512], index: 3, kind: output, shape index: {}]
  %s4 = sld [smem:[#allocation0]]
  $region22: #{conv_trans_block_forward.1} parent=0
    _
  %s6 = ssub.s32 1, %s4
  %s7 = scalar_select 0, %s6, %s4
  // Predicated region
  $region2: #{conv_trans_block_forward.1} parent=0 // pred_check
    _
  $region3: #{conv_trans_block_forward.1} parent=0 // pred_check_branch
    %9 = sbr.rel (0) target = $region5
  $region4: #{conv_trans_block_forward.1} parent=0 // pred_region
    _
  $region5: #{conv_trans_block_forward.1} parent=0 // pred_fallthru
    _
  // Predicated region
  $region6: #{conv_trans_block_forward.1} parent=0 // pred_check
    _
  $region7: #{conv_trans_block_forward.1} parent=0 // pred_check_branch
    %11 = sbr.rel (0) target = $region9
  $region8: #{conv_trans_block_forward.1} parent=0 // pred_region
    _
  $region9: #{conv_trans_block_forward.1} parent=0 // pred_fallthru
    _
  // Predicated region
  $region10: #{conv_trans_block_forward.1} parent=0 // pred_check
    _
  $region11: #{conv_trans_block_forward.1} parent=0 // pred_check_branch
    %13 = sbr.rel (0) target = $region13
  $region12: #{conv_trans_block_forward.1} parent=0 // pred_region
    _
  $region13: #{conv_trans_block_forward.1} parent=0 // pred_fallthru
    _
  %v14 = vld [vmem:[%s0] sm:$0xff]
  %v15 = vld [vmem:[%s0 + $0x8] sm:$0xff]
  %v16 = vld [vmem:[%s0 + $0x10] sm:$0xff]
  %v17 = vld [vmem:[%s0 + $0x18] sm:$0xff]
  %v18 = vld [vmem:[%s1] sm:$0xff]
  %v19 = vld [vmem:[%s1 + $0x8] sm:$0xff]
  %v20 = vld [vmem:[%s1 + $0x10] sm:$0xff]
  %v21 = vld [vmem:[%s1 + $0x18] sm:$0xff]
  %v22 = vld [vmem:[%s1 + $0x20] sm:$0xff]
  %v23 = vld [vmem:[%s1 + $0x28] sm:$0xff]
  %v24 = vld [vmem:[%s1 + $0x30] sm:$0xff]
  %v25 = vld [vmem:[%s1 + $0x38] sm:$0xff]
  %v26 = vld [vmem:[%s1 + $0x40] sm:$0xff]
  %v27 = vld [vmem:[%s1 + $0x48] sm:$0xff]
  %v28 = vld [vmem:[%s1 + $0x50] sm:$0xff]
  %v29 = vld [vmem:[%s1 + $0x58] sm:$0xff]
  %v30 = vld [vmem:[%s1 + $0x60] sm:$0xff]
  %v31 = vld [vmem:[%s1 + $0x68] sm:$0xff]
  %v32 = vld [vmem:[%s1 + $0x70] sm:$0xff]
  %v33 = vld [vmem:[%s1 + $0x78] sm:$0xff]
  %v34 = vld [vmem:[%s1 + $0x80] sm:$0xf]
  %v35 = vld [vmem:[%s1 + $0x88] sm:$0xf]
  %v36 = vld [vmem:[%s1 + $0x90] sm:$0xf]
  %v37 = vld [vmem:[%s1 + $0x98] sm:$0xf]
  %v38 = vld [vmem:[%s2] sm:$0xff]
  %v39 = vld [vmem:[%s2 + $0x8] sm:$0xff]
  %v40 = vld [vmem:[%s2 + $0x10] sm:$0xff]
  %v41 = vld [vmem:[%s2 + $0x18] sm:$0xff]
  %43 = vset.pattern.permute.xlu0 0
  %44 = vperm.xlu0 %43, %v38
  %v45 = vpop.permute.xlu0 %44
  %48 = vset.pattern.permute.xlu0 0
  %49 = vperm.xlu0 %48, %v39
  %v50 = vpop.permute.xlu0 %49
  %53 = vset.pattern.permute.xlu0 0
  %54 = vperm.xlu0 %53, %v40
  %v55 = vpop.permute.xlu0 %54
  %58 = vset.pattern.permute.xlu0 0
  %59 = vperm.xlu0 %58, %v41
  %v60 = vpop.permute.xlu0 %59
  %vm62 = vcmask 293888
  %v64 = vsel %vm62, %v14, 0
  %v67 = vsel %vm62, %v15, 0
  %v70 = vsel %vm62, %v16, 0
  %v73 = vsel %vm62, %v17, 0
  %vm75 = vcmask 1043456
  %v77 = vsel %vm75, %v34, 0
  %v80 = vsel %vm75, %v35, 0
  %v83 = vsel %vm75, %v36, 0
  %v86 = vsel %vm75, %v37, 0
  %88 = vmatpush.msra.mxu0 0.0
  %89 = vmatpush.msra.mxu0 0.0
  %90 = vmatpush.msra.mxu0 0.0
  %91 = vmatpush.msra.mxu0 0.0
  %92 = vmatpush.msra.mxu0 0.0
  %93 = vmatpush.msra.mxu0 0.0
  %94 = vmatpush.msra.mxu0 0.0
  %95 = vmatpush.msra.mxu0 0.0
  %96 = vmatpush.msra.mxu0 0.0
  %97 = vmatpush.msra.mxu0 0.0
  %98 = vmatpush.msra.mxu0 0.0
  %99 = vmatpush.msra.mxu0 %v77
  %100 = vmatpush.msra.mxu0 %v30
  %101 = vmatpush.msra.mxu0 %v26
  %102 = vmatpush.msra.mxu0 %v22
  %103 = vmatpush.msra.mxu0 %v18
  %104 = vmatmul.f32.gmra.mxu0 %v64
  %v105 = vpop.f32.mrf.mxu0
  %v106 = vadd.f32 %v45, %v105
  %107 = vmatmul.f32.gmra.mxu0 %v67
  %v108 = vpop.f32.mrf.mxu0
  %v109 = vadd.f32 %v50, %v108
  %110 = vmatmul.f32.gmra.mxu0 %v70
  %v111 = vpop.f32.mrf.mxu0
  %v112 = vadd.f32 %v55, %v111
  %113 = vmatmul.f32.gmra.mxu0 %v73
  %v114 = vpop.f32.mrf.mxu0
  %v115 = vadd.f32 %v60, %v114
  %116 = vdwg.mxu0
  %117 = vmatpush.msra.mxu0 0.0
  %118 = vmatpush.msra.mxu0 0.0
  %119 = vmatpush.msra.mxu0 0.0
  %120 = vmatpush.msra.mxu0 0.0
  %121 = vmatpush.msra.mxu0 0.0
  %122 = vmatpush.msra.mxu0 0.0
  %123 = vmatpush.msra.mxu0 0.0
  %124 = vmatpush.msra.mxu0 0.0
  %125 = vmatpush.msra.mxu0 0.0
  %126 = vmatpush.msra.mxu0 0.0
  %127 = vmatpush.msra.mxu0 0.0
  %128 = vmatpush.msra.mxu0 %v80
  %129 = vmatpush.msra.mxu0 %v31
  %130 = vmatpush.msra.mxu0 %v27
  %131 = vmatpush.msra.mxu0 %v23
  %132 = vmatpush.msra.mxu0 %v19
  %133 = vmatmul.f32.gmra.mxu0 %v64
  %v134 = vpop.f32.mrf.mxu0
  %v135 = vadd.f32 %v45, %v134
  %136 = vmatmul.f32.gmra.mxu0 %v67
  %v137 = vpop.f32.mrf.mxu0
  %v138 = vadd.f32 %v50, %v137
  %139 = vmatmul.f32.gmra.mxu0 %v70
  %v140 = vpop.f32.mrf.mxu0
  %v141 = vadd.f32 %v55, %v140
  %142 = vmatmul.f32.gmra.mxu0 %v73
  %v143 = vpop.f32.mrf.mxu0
  %v144 = vadd.f32 %v60, %v143
  %145 = vdwg.mxu0
  %146 = vmatpush.msra.mxu0 0.0
  %147 = vmatpush.msra.mxu0 0.0
  %148 = vmatpush.msra.mxu0 0.0
  %149 = vmatpush.msra.mxu0 0.0
  %150 = vmatpush.msra.mxu0 0.0
  %151 = vmatpush.msra.mxu0 0.0
  %152 = vmatpush.msra.mxu0 0.0
  %153 = vmatpush.msra.mxu0 0.0
  %154 = vmatpush.msra.mxu0 0.0
  %155 = vmatpush.msra.mxu0 0.0
  %156 = vmatpush.msra.mxu0 0.0
  %157 = vmatpush.msra.mxu0 %v83
  %158 = vmatpush.msra.mxu0 %v32
  %159 = vmatpush.msra.mxu0 %v28
  %160 = vmatpush.msra.mxu0 %v24
  %161 = vmatpush.msra.mxu0 %v20
  %162 = vmatmul.f32.gmra.mxu0 %v64
  %v163 = vpop.f32.mrf.mxu0
  %v164 = vadd.f32 %v45, %v163
  %165 = vmatmul.f32.gmra.mxu0 %v67
  %v166 = vpop.f32.mrf.mxu0
  %v167 = vadd.f32 %v50, %v166
  %168 = vmatmul.f32.gmra.mxu0 %v70
  %v169 = vpop.f32.mrf.mxu0
  %v170 = vadd.f32 %v55, %v169
  %171 = vmatmul.f32.gmra.mxu0 %v73
  %v172 = vpop.f32.mrf.mxu0
  %v173 = vadd.f32 %v60, %v172
  %174 = vdwg.mxu0
  %175 = vmatpush.msra.mxu0 0.0
  %176 = vmatpush.msra.mxu0 0.0
  %177 = vmatpush.msra.mxu0 0.0
  %178 = vmatpush.msra.mxu0 0.0
  %179 = vmatpush.msra.mxu0 0.0
  %180 = vmatpush.msra.mxu0 0.0
  %181 = vmatpush.msra.mxu0 0.0
  %182 = vmatpush.msra.mxu0 0.0
  %183 = vmatpush.msra.mxu0 0.0
  %184 = vmatpush.msra.mxu0 0.0
  %185 = vmatpush.msra.mxu0 0.0
  %186 = vmatpush.msra.mxu0 %v86
  %187 = vmatpush.msra.mxu0 %v33
  %188 = vmatpush.msra.mxu0 %v29
  %189 = vmatpush.msra.mxu0 %v25
  %190 = vmatpush.msra.mxu0 %v21
  %191 = vmatmul.f32.gmra.mxu0 %v64
  %v192 = vpop.f32.mrf.mxu0
  %v193 = vadd.f32 %v45, %v192
  %194 = vmatmul.f32.gmra.mxu0 %v67
  %v195 = vpop.f32.mrf.mxu0
  %v196 = vadd.f32 %v50, %v195
  %197 = vmatmul.f32.gmra.mxu0 %v70
  %v198 = vpop.f32.mrf.mxu0
  %v199 = vadd.f32 %v55, %v198
  %200 = vmatmul.f32.gmra.mxu0 %v73
  %v201 = vpop.f32.mrf.mxu0
  %v202 = vadd.f32 %v60, %v201
  %203 = vdwg.mxu0
  %v204 = vmax.f32 %v106, 0.0
  %v205 = vmax.f32 %v135, 0.0
  %v206 = vmax.f32 %v164, 0.0
  %v207 = vmax.f32 %v193, 0.0
  %v208 = vmax.f32 %v109, 0.0
  %v209 = vmax.f32 %v138, 0.0
  %v210 = vmax.f32 %v167, 0.0
  %v211 = vmax.f32 %v196, 0.0
  %v212 = vmax.f32 %v112, 0.0
  %v213 = vmax.f32 %v141, 0.0
  %v214 = vmax.f32 %v170, 0.0
  %v215 = vmax.f32 %v199, 0.0
  %v216 = vmax.f32 %v115, 0.0
  %v217 = vmax.f32 %v144, 0.0
  %v218 = vmax.f32 %v173, 0.0
  %v219 = vmax.f32 %v202, 0.0
  %220 = vst [vmem:[%s3] sm:$0xff] %v204
  %221 = vst [vmem:[%s3 + $0x8] sm:$0xff] %v205
  %222 = vst [vmem:[%s3 + $0x10] sm:$0xff] %v206
  %223 = vst [vmem:[%s3 + $0x18] sm:$0xff] %v207
  %224 = vst [vmem:[%s3 + $0x20] sm:$0xff] %v208
  %225 = vst [vmem:[%s3 + $0x28] sm:$0xff] %v209
  %226 = vst [vmem:[%s3 + $0x30] sm:$0xff] %v210
  %227 = vst [vmem:[%s3 + $0x38] sm:$0xff] %v211
  %228 = vst [vmem:[%s3 + $0x40] sm:$0xff] %v212
  %229 = vst [vmem:[%s3 + $0x48] sm:$0xff] %v213
  %230 = vst [vmem:[%s3 + $0x50] sm:$0xff] %v214
  %231 = vst [vmem:[%s3 + $0x58] sm:$0xff] %v215
  %232 = vst [vmem:[%s3 + $0x60] sm:$0xff] %v216
  %233 = vst [vmem:[%s3 + $0x68] sm:$0xff] %v217
  %234 = vst [vmem:[%s3 + $0x70] sm:$0xff] %v218
  %235 = vst [vmem:[%s3 + $0x78] sm:$0xff] %v219
  // Predicated region
  $region14: #{conv_trans_block_forward.1} parent=0 // pred_check
    _
  $region15: #{conv_trans_block_forward.1} parent=0 // pred_check_branch
    %237 = sbr.rel (0) target = $region17
  $region16: #{conv_trans_block_forward.1} parent=0 // pred_region
    _
  $region17: #{conv_trans_block_forward.1} parent=0 // pred_fallthru
    _
  // Predicated region
  $region18: #{conv_trans_block_forward.1} parent=0 // pred_check
    _
  $region19: #{conv_trans_block_forward.1} parent=0 // pred_check_branch
    %239 = sbr.rel (0) target = $region21
  $region20: #{conv_trans_block_forward.1} parent=0 // pred_region
    _
  $region21: #{conv_trans_block_forward.1} parent=0 // pred_fallthru
    _

</llo_original>
